<compile_context>
chip_gen: v7x
topology: tpu7x:2x2x1
jax: 0.10.0
libtpu: 0.0.40
codegen_flags: <defaults>
</compile_context>

<pallas_src>
import jax
import jax.numpy as jnp
from jax.experimental import pallas as pl
from jax.experimental.pallas import tpu as pltpu


def _round_up(n, m):
    return ((n + m - 1) // m) * m


def _sigmoid(z):
    return 1.0 / (1.0 + jnp.exp(-z))


# --------------------------------------------------------------------------
# One LSTM layer: grid over time, h/c carried in VMEM scratch.
# --------------------------------------------------------------------------
def _lstm_layer_kernel(x_ref, wih_ref, whh_ref, b_ref, h_out_ref, h_scr, c_scr):
    t = pl.program_id(0)

    @pl.when(t == 0)
    def _():
        h_scr[...] = jnp.zeros_like(h_scr)
        c_scr[...] = jnp.zeros_like(c_scr)

    H = h_scr.shape[-1]
    x_t = x_ref[0].astype(jnp.float32)                      # [B, D]
    h_prev = h_scr[...]
    c_prev = c_scr[...]

    # gates: [B, 4H], PyTorch gate order i, f, g, o
    gates = (
        jnp.dot(x_t, wih_ref[...], preferred_element_type=jnp.float32)
        + jnp.dot(h_prev, whh_ref[...], preferred_element_type=jnp.float32)
        + b_ref[...]
    )

    i = _sigmoid(gates[:, 0 * H:1 * H])
    f = _sigmoid(gates[:, 1 * H:2 * H])
    g = jnp.tanh(gates[:, 2 * H:3 * H])
    o = _sigmoid(gates[:, 3 * H:4 * H])

    c_new = f * c_prev + i * g
    h_new = o * jnp.tanh(c_new)

    h_scr[...] = h_new
    c_scr[...] = c_new
    h_out_ref[0] = h_new.astype(h_out_ref.dtype)


def lstm_layer_pallas(x_tbd, w_ih, w_hh, b_ih, b_hh):
    """x_tbd: [T, B, D] time-major. Weights in PyTorch layout ([4H,D],[4H,H],[4H])."""
    T, B, D = x_tbd.shape
    H = w_hh.shape[1]
    w_ih_t = jnp.transpose(w_ih).astype(jnp.float32)        # [D, 4H]
    w_hh_t = jnp.transpose(w_hh).astype(jnp.float32)        # [H, 4H]
    bias = (b_ih + b_hh).reshape(1, 4 * H).astype(jnp.float32)

    return pl.pallas_call(
        _lstm_layer_kernel,
        out_shape=jax.ShapeDtypeStruct((T, B, H), jnp.float32),
        grid=(T,),
        in_specs=[
            pl.BlockSpec((1, B, D), lambda t: (t, 0, 0)),    # x_t streamed per step
            pl.BlockSpec((D, 4 * H), lambda t: (0, 0)),      # weights resident
            pl.BlockSpec((H, 4 * H), lambda t: (0, 0)),
            pl.BlockSpec((1, 4 * H), lambda t: (0, 0)),
        ],
        out_specs=pl.BlockSpec((1, B, H), lambda t: (t, 0, 0)),
        scratch_shapes=[pltpu.VMEM((B, H), jnp.float32),     # h carry
                        pltpu.VMEM((B, H), jnp.float32)],    # c carry
        compiler_params=pltpu.CompilerParams(
            dimension_semantics=("arbitrary",)),             # sequential recurrence
    )(x_tbd.astype(jnp.float32), w_ih_t, w_hh_t, bias)


# --------------------------------------------------------------------------
# Fused Linear(+ReLU) and Linear(+clamp) over a lane-dense [N, K] slab.
# --------------------------------------------------------------------------
def _linear_relu_kernel(x_ref, w_ref, b_ref, o_ref):
    y = jnp.dot(x_ref[...], w_ref[...],
                preferred_element_type=jnp.float32) + b_ref[...]
    o_ref[...] = jnp.maximum(y, 0.0).astype(o_ref.dtype)


def _linear_clamp_kernel(ub_ref, x_ref, w_ref, b_ref, o_ref):
    y = jnp.dot(x_ref[...], w_ref[...],
                preferred_element_type=jnp.float32) + b_ref[...]
    ub = ub_ref[0]
    o_ref[...] = jnp.clip(y, 0.0, ub).astype(o_ref.dtype)


def _linear_pallas(x2d, w, b, kernel_fn, scalar=None, row_tile=512):
    """x2d: [N, K]; w: [M, K] (PyTorch Linear layout); b: [M]."""
    N, K = x2d.shape
    M = w.shape[0]
    w_t = jnp.transpose(w).astype(jnp.float32)               # [K, M]
    b_row = b.reshape(1, M).astype(jnp.float32)

    tile = min(_round_up(N, 8), row_tile)
    Np = _round_up(N, tile)
    x_p = x2d.astype(jnp.float32)
    if Np != N:
        x_p = jnp.pad(x_p, ((0, Np - N), (0, 0)))

    in_specs = [
        pl.BlockSpec((tile, K), lambda i: (i, 0)),
        pl.BlockSpec((K, M), lambda i: (0, 0)),
        pl.BlockSpec((1, M), lambda i: (0, 0)),
    ]
    args = [x_p, w_t, b_row]
    if scalar is not None:                                    # clamp upper bound
        in_specs = [pl.BlockSpec(memory_space=pltpu.MemorySpace.SMEM)] + in_specs
        args = [scalar.astype(jnp.float32)] + args

    out = pl.pallas_call(
        kernel_fn,
        out_shape=jax.ShapeDtypeStruct((Np, M), jnp.float32),
        grid=(Np // tile,),
        in_specs=in_specs,
        out_specs=pl.BlockSpec((tile, M), lambda i: (i, 0)),
        compiler_params=pltpu.CompilerParams(
            dimension_semantics=("parallel",)),
    )(*args)
    return out[:N]


# --------------------------------------------------------------------------
# Full Dual_LSTM forward (Pallas) and a pure-JAX reference.
# --------------------------------------------------------------------------
def dual_lstm_forward(x, params):
    """x: [B, T, input_size] (batch_first, like the PyTorch module)."""
    B, T, _ = x.shape
    h = jnp.transpose(x, (1, 0, 2)).astype(jnp.float32)      # [T, B, D] time-major

    for (w_ih, w_hh, b_ih, b_hh) in params["lstm1"]:
        h = lstm_layer_pallas(h, w_ih, w_hh, b_ih, b_hh)

    H1 = params["fc1_w"].shape[1]
    h2 = _linear_pallas(h.reshape(T * B, H1), params["fc1_w"], params["fc1_b"],
                        _linear_relu_kernel)                  # fc1 + ReLU fused
    h = h2.reshape(T, B, H1)

    for (w_ih, w_hh, b_ih, b_hh) in params["lstm2"]:
        h = lstm_layer_pallas(h, w_ih, w_hh, b_ih, b_hh)

    H2 = params["fc2_w"].shape[1]
    ub = jnp.max(x[:, -1, :]).reshape(1)                      # torch.max(x[:, -1].view(-1,1))
    o2 = _linear_pallas(h.reshape(T * B, H2), params["fc2_w"], params["fc2_b"],
                        _linear_clamp_kernel, scalar=ub)      # fc2 + clamp fused
    out = o2.reshape(T, B, -1)
    return jnp.transpose(out, (1, 0, 2))                      # [B, T, output_size]


def _lstm_layer_ref(x_btd, w_ih, w_hh, b_ih, b_hh):
    B, _, _ = x_btd.shape
    H = w_hh.shape[1]

    def step(carry, x_t):
        h, c = carry
        gates = x_t @ w_ih.T + b_ih + h @ w_hh.T + b_hh
        i, f, g, o = jnp.split(gates, 4, axis=-1)
        i, f, o = _sigmoid(i), _sigmoid(f), _sigmoid(o)
        g = jnp.tanh(g)
        c = f * c + i * g
        h = o * jnp.tanh(c)
        return (h, c), h

    h0 = jnp.zeros((B, H), jnp.float32)
    c0 = jnp.zeros((B, H), jnp.float32)
    _, hs = jax.lax.scan(step, (h0, c0), jnp.transpose(x_btd, (1, 0, 2)))
    return jnp.transpose(hs, (1, 0, 2))


def dual_lstm_ref(x, params):
    h = x.astype(jnp.float32)
    for (w_ih, w_hh, b_ih, b_hh) in params["lstm1"]:
        h = _lstm_layer_ref(h, w_ih, w_hh, b_ih, b_hh)
    h = jnp.maximum(h @ params["fc1_w"].T + params["fc1_b"], 0.0)
    for (w_ih, w_hh, b_ih, b_hh) in params["lstm2"]:
        h = _lstm_layer_ref(h, w_ih, w_hh, b_ih, b_hh)
    out = h @ params["fc2_w"].T + params["fc2_b"]
    ub = jnp.max(x[:, -1, :])
    return jnp.clip(out, 0.0, ub)


def init_params(key, input_size, hidden1, hidden2, num_layers, output_size):
    def lstm_stack(key, in_dim, hidden, n_layers):
        layers = []
        bound = hidden ** -0.5
        d = in_dim
        for _ in range(n_layers):
            key, k1, k2, k3, k4 = jax.random.split(key, 5)
            layers.append((
                jax.random.uniform(k1, (4 * hidden, d), jnp.float32, -bound, bound),
                jax.random.uniform(k2, (4 * hidden, hidden), jnp.float32, -bound, bound),
                jax.random.uniform(k3, (4 * hidden,), jnp.float32, -bound, bound),
                jax.random.uniform(k4, (4 * hidden,), jnp.float32, -bound, bound),
            ))
            d = hidden
        return key, layers

    key, lstm1 = lstm_stack(key, input_size, hidden1, num_layers)
    key, lstm2 = lstm_stack(key, hidden1, hidden2, num_layers)
    key, kf1w, kf1b, kf2w, kf2b = jax.random.split(key, 5)
    b1 = hidden1 ** -0.5
    b2 = hidden2 ** -0.5
    return {
        "lstm1": lstm1,
        "lstm2": lstm2,
        "fc1_w": jax.random.uniform(kf1w, (hidden1, hidden1), jnp.float32, -b1, b1),
        "fc1_b": jax.random.uniform(kf1b, (hidden1,), jnp.float32, -b1, b1),
        "fc2_w": jax.random.uniform(kf2w, (output_size, hidden2), jnp.float32, -b2, b2),
        "fc2_b": jax.random.uniform(kf2b, (output_size,), jnp.float32, -b2, b2),
    }


if __name__ == "__main__":
    key = jax.random.PRNGKey(0)
    B, T = 2, 8
    input_size, hidden1, hidden2, num_layers, output_size = 4, 32, 16, 2, 1

    kx, kp = jax.random.split(key)
    x = jax.random.normal(kx, (B, T, input_size), dtype=jnp.float32)
    params = init_params(kp, input_size, hidden1, hidden2, num_layers, output_size)

    out = jax.block_until_ready(dual_lstm_forward(x, params))
    ref = jax.block_until_ready(dual_lstm_ref(x, params))

    assert out.shape == (B, T, output_size), out.shape
    assert jnp.allclose(out, ref, rtol=2e-3, atol=2e-3), \
        float(jnp.max(jnp.abs(out - ref)))
    print("KERNEL_OK")
</pallas_src>

<mosaic_0001>
module attributes {stable_mosaic.version = 11 : i64} {
  func.func @_lstm_layer_kernel(%arg0: i32, %arg1: memref<1x2x4xf32, #tpu.memory_space<vmem>>, %arg2: memref<4x128xf32, #tpu.memory_space<vmem>>, %arg3: memref<32x128xf32, #tpu.memory_space<vmem>>, %arg4: memref<1x128xf32, #tpu.memory_space<vmem>>, %arg5: memref<1x2x32xf32, #tpu.memory_space<vmem>>, %arg6: memref<2x32xf32, #tpu.memory_space<vmem>>, %arg7: memref<2x32xf32, #tpu.memory_space<vmem>>) attributes {dimension_semantics = [#tpu.dimension_semantics<arbitrary>], iteration_bounds = array<i64: 8>, scalar_prefetch = 0 : i64, scratch_operands = 2 : i64, tpu.core_type = #tpu.core_type<tc>, window_params = [{transform_indices = @transform_0, window_bounds = array<i64: 1, 2, 4>}, {pipeline_mode = #tpu.pipeline_mode<synchronous>, transform_indices = @transform_1, window_bounds = array<i64: 4, 128>}, {pipeline_mode = #tpu.pipeline_mode<synchronous>, transform_indices = @transform_2, window_bounds = array<i64: 32, 128>}, {pipeline_mode = #tpu.pipeline_mode<synchronous>, transform_indices = @transform_3, window_bounds = array<i64: 1, 128>}, {transform_indices = @transform_4, window_bounds = array<i64: 1, 2, 32>}]} {
    %c0_i32 = arith.constant 0 : i32
    %0 = arith.cmpi eq, %arg0, %c0_i32 : i32
    %1 = arith.extui %0 : i1 to i32
    %c0_i32_0 = arith.constant 0 : i32
    %2 = arith.cmpi ne, %1, %c0_i32_0 : i32
    scf.if %2 {
      %cst_30 = arith.constant 0.000000e+00 : f32
      %51 = vector.broadcast %cst_30 : f32 to vector<2x32xf32>
      %c0_31 = arith.constant 0 : index
      %c0_32 = arith.constant 0 : index
      %52 = vector.load %arg6[%c0_31, %c0_32] : memref<2x32xf32, #tpu.memory_space<vmem>>, vector<2x32xf32>
      tpu.vector_store %arg6[%c0_31, %c0_32], %51 {strides = array<i32>} : memref<2x32xf32, #tpu.memory_space<vmem>>, vector<2x32xf32>,
      %cst_33 = arith.constant 0.000000e+00 : f32
      %53 = vector.broadcast %cst_33 : f32 to vector<2x32xf32>
      %c0_34 = arith.constant 0 : index
      %c0_35 = arith.constant 0 : index
      %54 = vector.load %arg7[%c0_34, %c0_35] : memref<2x32xf32, #tpu.memory_space<vmem>>, vector<2x32xf32>
      tpu.vector_store %arg7[%c0_34, %c0_35], %53 {strides = array<i32>} : memref<2x32xf32, #tpu.memory_space<vmem>>, vector<2x32xf32>,
    } else {
    }
    %c0 = arith.constant 0 : index
    %c0_1 = arith.constant 0 : index
    %c0_2 = arith.constant 0 : index
    %3 = vector.load %arg1[%c0, %c0_1, %c0_2] : memref<1x2x4xf32, #tpu.memory_space<vmem>>, vector<1x2x4xf32>
    %4 = vector.shape_cast %3 : vector<1x2x4xf32> to vector<2x4xf32>
    %c0_3 = arith.constant 0 : index
    %c0_4 = arith.constant 0 : index
    %5 = vector.load %arg6[%c0_3, %c0_4] : memref<2x32xf32, #tpu.memory_space<vmem>>, vector<2x32xf32>
    %c0_5 = arith.constant 0 : index
    %c0_6 = arith.constant 0 : index
    %6 = vector.load %arg7[%c0_5, %c0_6] : memref<2x32xf32, #tpu.memory_space<vmem>>, vector<2x32xf32>
    %c0_7 = arith.constant 0 : index
    %c0_8 = arith.constant 0 : index
    %7 = vector.load %arg2[%c0_7, %c0_8] : memref<4x128xf32, #tpu.memory_space<vmem>>, vector<4x128xf32>
    %cst = arith.constant dense<0.000000e+00> : vector<2x128xf32>
    %8 = tpu.matmul %4, %7, %cst {dimension_numbers = #tpu.dot_dimension_numbers<[1], [0], [0], [1], [0, 0, 1, 1], [], []>} : vector<2x4xf32>, vector<4x128xf32>, vector<2x128xf32> -> vector<2x128xf32>
    %c0_9 = arith.constant 0 : index
    %c0_10 = arith.constant 0 : index
    %9 = vector.load %arg3[%c0_9, %c0_10] : memref<32x128xf32, #tpu.memory_space<vmem>>, vector<32x128xf32>
    %cst_11 = arith.constant dense<0.000000e+00> : vector<2x128xf32>
    %10 = tpu.matmul %5, %9, %cst_11 {dimension_numbers = #tpu.dot_dimension_numbers<[1], [0], [0], [1], [0, 0, 1, 1], [], []>} : vector<2x32xf32>, vector<32x128xf32>, vector<2x128xf32> -> vector<2x128xf32>
    %11 = arith.addf %8, %10 : vector<2x128xf32>
    %c0_12 = arith.constant 0 : index
    %c0_13 = arith.constant 0 : index
    %12 = vector.load %arg4[%c0_12, %c0_13] : memref<1x128xf32, #tpu.memory_space<vmem>>, vector<1x128xf32>
    %13 = vector.broadcast %12 : vector<1x128xf32> to vector<2x128xf32>
    %14 = arith.addf %11, %13 : vector<2x128xf32>
    %15 = vector.extract_strided_slice %14 {offsets = [0, 0], sizes = [2, 32], strides = [1, 1]} : vector<2x128xf32> to vector<2x32xf32>
    %cst_14 = arith.constant 0.000000e+00 : f32
    %16 = vector.broadcast %cst_14 : f32 to vector<2x32xf32>
    %17 = arith.subf %16, %15 : vector<2x32xf32>
    %18 = math.exp %17 : vector<2x32xf32>
    %cst_15 = arith.constant 1.000000e+00 : f32
    %19 = vector.broadcast %cst_15 : f32 to vector<2x32xf32>
    %20 = arith.addf %19, %18 : vector<2x32xf32>
    %cst_16 = arith.constant 1.000000e+00 : f32
    %21 = vector.broadcast %cst_16 : f32 to vector<2x32xf32>
    %22 = arith.divf %21, %20 : vector<2x32xf32>
    %23 = vector.extract_strided_slice %14 {offsets = [0, 32], sizes = [2, 32], strides = [1, 1]} : vector<2x128xf32> to vector<2x32xf32>
    %cst_17 = arith.constant 0.000000e+00 : f32
    %24 = vector.broadcast %cst_17 : f32 to vector<2x32xf32>
    %25 = arith.subf %24, %23 : vector<2x32xf32>
    %26 = math.exp %25 : vector<2x32xf32>
    %cst_18 = arith.constant 1.000000e+00 : f32
    %27 = vector.broadcast %cst_18 : f32 to vector<2x32xf32>
    %28 = arith.addf %27, %26 : vector<2x32xf32>
    %cst_19 = arith.constant 1.000000e+00 : f32
    %29 = vector.broadcast %cst_19 : f32 to vector<2x32xf32>
    %30 = arith.divf %29, %28 : vector<2x32xf32>
    %31 = vector.extract_strided_slice %14 {offsets = [0, 64], sizes = [2, 32], strides = [1, 1]} : vector<2x128xf32> to vector<2x32xf32>
    %32 = math.tanh %31 : vector<2x32xf32>
    %33 = vector.extract_strided_slice %14 {offsets = [0, 96], sizes = [2, 32], strides = [1, 1]} : vector<2x128xf32> to vector<2x32xf32>
    %cst_20 = arith.constant 0.000000e+00 : f32
    %34 = vector.broadcast %cst_20 : f32 to vector<2x32xf32>
    %35 = arith.subf %34, %33 : vector<2x32xf32>
    %36 = math.exp %35 : vector<2x32xf32>
    %cst_21 = arith.constant 1.000000e+00 : f32
    %37 = vector.broadcast %cst_21 : f32 to vector<2x32xf32>
    %38 = arith.addf %37, %36 : vector<2x32xf32>
    %cst_22 = arith.constant 1.000000e+00 : f32
    %39 = vector.broadcast %cst_22 : f32 to vector<2x32xf32>
    %40 = arith.divf %39, %38 : vector<2x32xf32>
    %41 = arith.mulf %30, %6 : vector<2x32xf32>
    %42 = arith.mulf %22, %32 : vector<2x32xf32>
    %43 = arith.addf %41, %42 : vector<2x32xf32>
    %44 = math.tanh %43 : vector<2x32xf32>
    %45 = arith.mulf %40, %44 : vector<2x32xf32>
    %c0_23 = arith.constant 0 : index
    %c0_24 = arith.constant 0 : index
    %46 = vector.load %arg6[%c0_23, %c0_24] : memref<2x32xf32, #tpu.memory_space<vmem>>, vector<2x32xf32>
    tpu.vector_store %arg6[%c0_23, %c0_24], %45 {strides = array<i32>} : memref<2x32xf32, #tpu.memory_space<vmem>>, vector<2x32xf32>,
    %c0_25 = arith.constant 0 : index
    %c0_26 = arith.constant 0 : index
    %47 = vector.load %arg7[%c0_25, %c0_26] : memref<2x32xf32, #tpu.memory_space<vmem>>, vector<2x32xf32>
    tpu.vector_store %arg7[%c0_25, %c0_26], %43 {strides = array<i32>} : memref<2x32xf32, #tpu.memory_space<vmem>>, vector<2x32xf32>,
    %c0_27 = arith.constant 0 : index
    %c0_28 = arith.constant 0 : index
    %c0_29 = arith.constant 0 : index
    %48 = vector.load %arg5[%c0_27, %c0_28, %c0_29] : memref<1x2x32xf32, #tpu.memory_space<vmem>>, vector<1x2x32xf32>
    %49 = vector.shape_cast %48 : vector<1x2x32xf32> to vector<2x32xf32>
    %50 = vector.shape_cast %45 : vector<2x32xf32> to vector<1x2x32xf32>
    tpu.vector_store %arg5[%c0_27, %c0_28, %c0_29], %50 {strides = array<i32>} : memref<1x2x32xf32, #tpu.memory_space<vmem>>, vector<1x2x32xf32>,
    return
  }
  func.func @transform_0(%arg0: i32) -> (i32, i32, i32) {
    %c0_i32 = arith.constant 0 : i32
    %c0_i32_0 = arith.constant 0 : i32
    %c0_i32_1 = arith.constant 0 : i32
    return %arg0, %c0_i32, %c0_i32_0 : i32, i32, i32
  }
  func.func @transform_1(%arg0: i32) -> (i32, i32) {
    %c0_i32 = arith.constant 0 : i32
    %c0_i32_0 = arith.constant 0 : i32
    %c0_i32_1 = arith.constant 0 : i32
    return %c0_i32, %c0_i32_0 : i32, i32
  }
  func.func @transform_2(%arg0: i32) -> (i32, i32) {
    %c0_i32 = arith.constant 0 : i32
    %c0_i32_0 = arith.constant 0 : i32
    %c0_i32_1 = arith.constant 0 : i32
    return %c0_i32, %c0_i32_0 : i32, i32
  }
  func.func @transform_3(%arg0: i32) -> (i32, i32) {
    %c0_i32 = arith.constant 0 : i32
    %c0_i32_0 = arith.constant 0 : i32
    %c0_i32_1 = arith.constant 0 : i32
    return %c0_i32, %c0_i32_0 : i32, i32
  }
  func.func @transform_4(%arg0: i32) -> (i32, i32, i32) {
    %c0_i32 = arith.constant 0 : i32
    %c0_i32_0 = arith.constant 0 : i32
    %c0_i32_1 = arith.constant 0 : i32
    return %arg0, %c0_i32, %c0_i32_0 : i32, i32, i32
  }
}

</mosaic_0001>

<llo_original>
// kernel: tpu_custom_call.1
$region0: #{tpu_custom_call.1}
  #allocation0 [shape = 'u32[]', space=smem, size = 0x4, offset = 0x4, fixed_abs, tag = 'smem constant byte address 0x4 - core index']
  #allocation1 [shape = 'u32[144,128]{1,0:T(1,128)}', space=vmem, size = 0x12000, scoped, tag = 'internal scratch']
  #allocation2 [shape = 'f32[2,32]{1,0:T(2,128)}', space=vmem, size = 0x400, scoped, tag = 'scratch operand']
  #allocation3 [shape = 'f32[2,32]{1,0:T(2,128)}', space=vmem, size = 0x400, scoped, tag = 'scratch operand']
  %s0 = inlined_call_operand.vmem [shape: f32[8,2,4], index: 0, kind: input, shape index: {}]
  %s1 = inlined_call_operand.vmem [shape: f32[4,128], index: 1, kind: input, shape index: {}]
  %s2 = inlined_call_operand.hbm [shape: f32[32,128], index: 2, kind: input, shape index: {}]
  %s3 = inlined_call_operand.vmem [shape: f32[1,128], index: 3, kind: input, shape index: {}]
  %s4 = inlined_call_operand.hbm [shape: f32[8,2,32], index: 4, kind: output, shape index: {}]
  %s5 = sld [smem:[#allocation0]]
  $region57: #{tpu_custom_call.1} parent=0
    _
  %s7 = ssub.s32 1, %s5
  %s8 = scalar_select 0, %s7, %s5
  $region1: #{tpu_custom_call.1} parent=0
    #allocation4 [shape = 'u8[16384]{0}', space=vmem, size = 0x4000, scoped, tag = 'input window, operand 2, single buffered']
    #allocation5 [shape = 's32[2]{0}', space=sflag, size = 0x8, scoped, tag = 'scoped memory for tpu_custom_call.1']
    #allocation6 [shape = 's32[2]{0}', space=sflag, size = 0x8, scoped, tag = 'scoped memory for tpu_custom_call.1']
    #allocation7 [shape = 'u8[2048]{0}', space=vmem, size = 0x800, scoped, tag = 'output window, operand 0']
    %9 = vsyncpa [#allocation5], 0
    %10 = vsyncpa [#allocation6], 0
    %s11 = scalar_lea.sflag [#allocation6], 1
    %12 = vsyncpa %s11, 0
    loop: start=0, step=1, limit=10
    $region2: #{tpu_custom_call.1} parent=1 // loop_pre_header
      _
    $region3: #{tpu_custom_call.1} parent=1 // loop_header
      %s14 = sphi 0, %s18
      %p15 = scmp.ge.s32.totalorder %s14, 10
      %s24 = sphi 0, %s26
      %s27 = sphi 0, %s24
      %s28 = sphi 0, %s27
      %s44 = sphi 0, %s28
      %s48 = sphi 0, %s48
      %s50 = sphi 0, %s48
      %s51 = sphi 0, %s50
      %s65 = sphi 0, %s51
      %s69 = sphi 0, %s69
      %s71 = sphi 0, %s69
      %s72 = sphi 0, %s71
      %s86 = sphi 0, %s72
      %s90 = sphi 0, %s90
      %s92 = sphi 0, %s90
      %s93 = sphi 0, %s92
      %s107 = sphi 0, %s93
      %s113 = sphi 0, %s115
      %s116 = sphi 0, %s113
      %s117 = sphi 0, %s116
      %s133 = sphi 0, %s117
    $region4: #{tpu_custom_call.1} parent=1 // loop_header_branch
      %17 = sbr.rel (%p15) target = $region8
    $region5: #{tpu_custom_call.1} parent=1 // loop_body
      %s19 = ssub.s32 %s14, 1
      %s20 = ssub.s32 %s14, 2
      %s21 = sadd.s32 %s14, 1
      %s22 = ssub.s32 %s14, %s21
      %p23 = scmp.eq.s32.totalorder %s22, 0
      %s25 = sadd.s32 %s24, 1
      %s26 = scalar_select %p23, %s24, %s25
      %p29 = pneg %p23
      %p30 = scmp.eq.s32.totalorder %s14, 7
      %p31 = por %p29, %p30
      %p32 = scmp.ne.s32.totalorder %s24, %s27
      %p33 = scmp.eq.s32.totalorder %s14, 0
      %p34 = por %p32, %p33
      %p35 = scmp.ne.s32.totalorder %s24, %s27
      %p36 = scmp.eq.s32.totalorder %s19, 7
      %p37 = por %p35, %p36
      %p38 = scmp.ne.s32.totalorder %s27, %s28
      %p39 = scmp.eq.s32.totalorder %s19, 0
      %p40 = por %p38, %p39
      %p41 = scmp.ne.s32.totalorder %s27, %s28
      %p42 = scmp.eq.s32.totalorder %s20, 7
      %p43 = por %p41, %p42
      %p45 = scmp.ne.s32.totalorder %s28, %s44
      %p46 = scmp.eq.s32.totalorder %s20, 0
      %p47 = por %p45, %p46
      %s49 = sadd.s32 %s48, 1
      %p52 = scmp.eq.s32.totalorder %s14, 7
      %p53 = scmp.ne.s32.totalorder %s48, %s50
      %p54 = scmp.eq.s32.totalorder %s14, 0
      %p55 = por %p53, %p54
      %p56 = scmp.ne.s32.totalorder %s48, %s50
      %p57 = scmp.eq.s32.totalorder %s19, 7
      %p58 = por %p56, %p57
      %p59 = scmp.ne.s32.totalorder %s50, %s51
      %p60 = scmp.eq.s32.totalorder %s19, 0
      %p61 = por %p59, %p60
      %p62 = scmp.ne.s32.totalorder %s50, %s51
      %p63 = scmp.eq.s32.totalorder %s20, 7
      %p64 = por %p62, %p63
      %p66 = scmp.ne.s32.totalorder %s51, %s65
      %p67 = scmp.eq.s32.totalorder %s20, 0
      %p68 = por %p66, %p67
      %s70 = sadd.s32 %s69, 1
      %p73 = scmp.eq.s32.totalorder %s14, 7
      %p74 = scmp.ne.s32.totalorder %s69, %s71
      %p75 = scmp.eq.s32.totalorder %s14, 0
      %p76 = por %p74, %p75
      %p77 = scmp.ne.s32.totalorder %s69, %s71
      %p78 = scmp.eq.s32.totalorder %s19, 7
      %p79 = por %p77, %p78
      %p80 = scmp.ne.s32.totalorder %s71, %s72
      %p81 = scmp.eq.s32.totalorder %s19, 0
      %p82 = por %p80, %p81
      %p83 = scmp.ne.s32.totalorder %s71, %s72
      %p84 = scmp.eq.s32.totalorder %s20, 7
      %p85 = por %p83, %p84
      %p87 = scmp.ne.s32.totalorder %s72, %s86
      %p88 = scmp.eq.s32.totalorder %s20, 0
      %p89 = por %p87, %p88
      %s91 = sadd.s32 %s90, 1
      %p94 = scmp.eq.s32.totalorder %s14, 7
      %p95 = scmp.ne.s32.totalorder %s90, %s92
      %p96 = scmp.eq.s32.totalorder %s14, 0
      %p97 = por %p95, %p96
      %p98 = scmp.ne.s32.totalorder %s90, %s92
      %p99 = scmp.eq.s32.totalorder %s19, 7
      %p100 = por %p98, %p99
      %p101 = scmp.ne.s32.totalorder %s92, %s93
      %p102 = scmp.eq.s32.totalorder %s19, 0
      %p103 = por %p101, %p102
      %p104 = scmp.ne.s32.totalorder %s92, %s93
      %p105 = scmp.eq.s32.totalorder %s20, 7
      %p106 = por %p104, %p105
      %p108 = scmp.ne.s32.totalorder %s93, %s107
      %p109 = scmp.eq.s32.totalorder %s20, 0
      %p110 = por %p108, %p109
      %s111 = ssub.s32 %s14, %s21
      %p112 = scmp.eq.s32.totalorder %s111, 0
      %s114 = sadd.s32 %s113, 1
      %s115 = scalar_select %p112, %s113, %s114
      %p118 = pneg %p112
      %p119 = scmp.eq.s32.totalorder %s14, 7
      %p120 = por %p118, %p119
      %p121 = scmp.ne.s32.totalorder %s113, %s116
      %p122 = scmp.eq.s32.totalorder %s14, 0
      %p123 = por %p121, %p122
      %p124 = scmp.ne.s32.totalorder %s113, %s116
      %p125 = scmp.eq.s32.totalorder %s19, 7
      %p126 = por %p124, %p125
      %p127 = scmp.ne.s32.totalorder %s116, %s117
      %p128 = scmp.eq.s32.totalorder %s19, 0
      %p129 = por %p127, %p128
      %p130 = scmp.ne.s32.totalorder %s116, %s117
      %p131 = scmp.eq.s32.totalorder %s20, 7
      %p132 = por %p130, %p131
      %p134 = scmp.ne.s32.totalorder %s117, %s133
      %p135 = scmp.eq.s32.totalorder %s20, 0
      %p136 = por %p134, %p135
      %p137 = scmp.le.s32.totalorder 1, %s14
      %p138 = scmp.lt.s32.totalorder %s14, 9
      %p139 = pnand %p137, %p138
      %p140 = pneg %p139
      // Predicated region
      $region9: #{tpu_custom_call.1} parent=5 // pred_check
        _
      $region10: #{tpu_custom_call.1} parent=5 // pred_check_branch
        %142 = sbr.rel (%p139) target = $region12
      $region11: #{tpu_custom_call.1} parent=5 // pred_region
        %s143 = ssub.s32 %s14, 1
        // Predicated region
        $region13: #{tpu_custom_call.1} parent=11 // pred_check
          %p144 = pneg %p61
        $region14: #{tpu_custom_call.1} parent=11 // pred_check_branch
          %146 = sbr.rel (%p144) target = $region16
        $region15: #{tpu_custom_call.1} parent=11 // pred_region
          _
        $region16: #{tpu_custom_call.1} parent=11 // pred_fallthru
          _
        // Predicated region
        $region17: #{tpu_custom_call.1} parent=11 // pred_check
          %p147 = pneg %p82
        $region18: #{tpu_custom_call.1} parent=11 // pred_check_branch
          %149 = sbr.rel (%p147) target = $region20
        $region19: #{tpu_custom_call.1} parent=11 // pred_region
          %s151 = ssub.s32 512, 512
          %152 = vsyncadd [#allocation5], %s151
          %s153 = sshll.u32 [#allocation4], 4
          %s154 = int_to_ptr.vmem [resolvable:$true] %s153
          %159 = dma.hbm_to_vmem [thread:$0]  %s2, 512, %s154, [#allocation5], 128, 128, 8
        $region20: #{tpu_custom_call.1} parent=11 // pred_fallthru
          _
        // Predicated region
        $region21: #{tpu_custom_call.1} parent=11 // pred_check
          %p160 = pneg %p103
        $region22: #{tpu_custom_call.1} parent=11 // pred_check_branch
          %162 = sbr.rel (%p160) target = $region24
        $region23: #{tpu_custom_call.1} parent=11 // pred_region
          _
        $region24: #{tpu_custom_call.1} parent=11 // pred_fallthru
          _
      $region12: #{tpu_custom_call.1} parent=5 // pred_fallthru
        _
      %p163 = scmp.lt.s32.totalorder %s14, 8
      // Predicated region
      $region25: #{tpu_custom_call.1} parent=5 // pred_check
        %p164 = pneg %p163
      $region26: #{tpu_custom_call.1} parent=5 // pred_check_branch
        %166 = sbr.rel (%p164) target = $region28
      $region27: #{tpu_custom_call.1} parent=5 // pred_region
        // Predicated region
        $region29: #{tpu_custom_call.1} parent=27 // pred_check
          %p167 = pneg %p34
        $region30: #{tpu_custom_call.1} parent=27 // pred_check_branch
          %169 = sbr.rel (%p167) target = $region32
        $region31: #{tpu_custom_call.1} parent=27 // pred_region
          %p170 = scmp.lt.s32.totalorder %s14, 7
          %s171 = scalar_select %p170, %s14, 7
          %s172 = smul.addr %s171, 2
          %s173 = scalar_lea.vmem %s0, %s172
        $region32: #{tpu_custom_call.1} parent=27 // pred_fallthru
          _
      $region28: #{tpu_custom_call.1} parent=5 // pred_fallthru
        _
      %p174 = scmp.le.s32.totalorder 1, %s14
      %p175 = scmp.lt.s32.totalorder %s14, 9
      %p176 = pnand %p174, %p175
      %p177 = pneg %p176
      // Predicated region
      $region33: #{tpu_custom_call.1} parent=5 // pred_check
        _
      $region34: #{tpu_custom_call.1} parent=5 // pred_check_branch
        %179 = sbr.rel (%p176) target = $region36
      $region35: #{tpu_custom_call.1} parent=5 // pred_region
        %s180 = ssub.s32 %s14, 1
        // Predicated region
        $region37: #{tpu_custom_call.1} parent=35 // pred_check
          %p181 = pneg %p82
        $region38: #{tpu_custom_call.1} parent=35 // pred_check_branch
          %183 = sbr.rel (%p181) target = $region40
        $region39: #{tpu_custom_call.1} parent=35 // pred_region
          %184 = dma.done [#allocation5], 512
        $region40: #{tpu_custom_call.1} parent=35 // pred_fallthru
          _
        %p185 = scmp.lt.s32.totalorder %s19, 7
        %s186 = scalar_select %p185, %s19, 7
        %s187 = smul.addr %s186, 2
        %s188 = scalar_lea.vmem %s0, %s187
        %p189 = pneg %p40
        %p190 = pneg %p37
        %p191 = pneg %p61
        %p192 = pneg %p58
        %p193 = pneg %p82
        %p194 = pneg %p79
        %p195 = pneg %p103
        %p196 = pneg %p100
        %p197 = pneg %p129
        %p198 = pneg %p126
        %s199 = sand.u32 %s116, 1
        %s200 = scalar_lea.sflag [#allocation6], %s199
        %s201 = sand.u32 %s116, 1
        %s202 = smul.addr %s201, 2
        %s203 = scalar_lea.vmem [#allocation7], %s202
        %p204 = scmp.lt.s32.totalorder %s19, 7
        %s205 = scalar_select %p204, %s19, 7
        %s206 = smul.addr %s205, 2
        %s207 = scalar_lea.vmem %s0, %s206
        %p208 = scmp.eq.s32.totalorder %s19, 0
        // Predicated region
        $region41: #{tpu_custom_call.1} parent=35 // pred_check
          %p209 = pneg %p208
        $region42: #{tpu_custom_call.1} parent=35 // pred_check_branch
          %211 = sbr.rel (%p209) target = $region44
        $region43: #{tpu_custom_call.1} parent=35 // pred_region
          %vm212 = vcmask 254976
          %213 = vst.msk [vmem:[#allocation2] sm:$0x3] %vm212, 0.0
          %214 = vst.msk [vmem:[#allocation3] sm:$0x3] %vm212, 0.0
        $region44: #{tpu_custom_call.1} parent=35 // pred_fallthru
          _
        %v215 = vld [vmem:[%s207] sm:$0x3]
        %v216 = vld [vmem:[#allocation2] sm:$0x3]
        %v217 = vld [vmem:[#allocation3] sm:$0x3]
        %v218 = vld [vmem:[%s1] sm:$0xf]
        %v219 = vld [vmem:[#allocation4] sm:$0xff]
        %v220 = vld [vmem:[#allocation4 + $0x8] sm:$0xff]
        %v221 = vld [vmem:[#allocation4 + $0x10] sm:$0xff]
        %v222 = vld [vmem:[#allocation4 + $0x18] sm:$0xff]
        %vm223 = vcmask 261120
        %v225 = vsel %vm223, %v216, 0
        %227 = vmatprep.subr.mxu0 0.0
        %228 = vmatpush1.msra.mxu0 %v219
        %229 = vmatprep.subr.mxu0 0.0
        %230 = vmatpush1.msra.mxu0 %v220
        %231 = vmatprep.subr.mxu0 0.0
        %232 = vmatpush1.msra.mxu0 %v221
        %233 = vmatprep.subr.mxu0 0.0
        %234 = vmatpush1.msra.mxu0 %v222
        %235 = vmatprep.subr.mxu0 0.0
        %236 = vmatpush1.msra.mxu0 0.0
        %237 = vmatprep.subr.mxu0 0.0
        %238 = vmatpush1.msra.mxu0 0.0
        %239 = vmatprep.subr.mxu0 0.0
        %240 = vmatpush1.msra.mxu0 0.0
        %241 = vmatprep.subr.mxu0 0.0
        %242 = vmatpush1.msra.mxu0 0.0
        %243 = vmatprep.subr.mxu0 0.0
        %244 = vmatpush1.msra.mxu0 0.0
        %245 = vmatprep.subr.mxu0 0.0
        %246 = vmatpush1.msra.mxu0 0.0
        %247 = vmatprep.subr.mxu0 0.0
        %248 = vmatpush1.msra.mxu0 0.0
        %249 = vmatprep.subr.mxu0 0.0
        %250 = vmatpush1.msra.mxu0 0.0
        %251 = vmatprep.subr.mxu0 0.0
        %252 = vmatpush1.msra.mxu0 0.0
        %253 = vmatprep.subr.mxu0 0.0
        %254 = vmatpush1.msra.mxu0 0.0
        %255 = vmatprep.subr.mxu0 0.0
        %256 = vmatpush1.msra.mxu0 0.0
        %257 = vmatprep.subr.mxu0 0.0
        %258 = vmatpush1.msra.mxu0 0.0
        %259 = vmatprep.subr.mxu0 0.0
        %260 = vmatpush1.msra.mxu0 0.0
        %261 = vmatprep.subr.mxu0 0.0
        %262 = vmatpush1.msra.mxu0 0.0
        %263 = vmatprep.subr.mxu0 0.0
        %264 = vmatpush1.msra.mxu0 0.0
        %265 = vmatprep.subr.mxu0 0.0
        %266 = vmatpush1.msra.mxu0 0.0
        %267 = vmatprep.subr.mxu0 0.0
        %268 = vmatpush1.msra.mxu0 0.0
        %269 = vmatprep.subr.mxu0 0.0
        %270 = vmatpush1.msra.mxu0 0.0
        %271 = vmatprep.subr.mxu0 0.0
        %272 = vmatpush1.msra.mxu0 0.0
        %273 = vmatprep.subr.mxu0 0.0
        %274 = vmatpush1.msra.mxu0 0.0
        %275 = vmatprep.subr.mxu0 0.0
        %276 = vmatpush1.msra.mxu0 0.0
        %277 = vmatprep.subr.mxu0 0.0
        %278 = vmatpush1.msra.mxu0 0.0
        %279 = vmatprep.subr.mxu0 0.0
        %280 = vmatpush1.msra.mxu0 0.0
        %281 = vmatprep.subr.mxu0 0.0
        %282 = vmatpush1.msra.mxu0 0.0
        %283 = vmatprep.subr.mxu0 0.0
        %284 = vmatpush1.msra.mxu0 0.0
        %285 = vmatprep.subr.mxu0 0.0
        %286 = vmatpush1.msra.mxu0 0.0
        %287 = vmatprep.subr.mxu0 0.0
        %288 = vmatpush1.msra.mxu0 0.0
        %289 = vmatprep.subr.mxu0 0.0
        %290 = vmatpush1.msra.mxu0 0.0
        %291 = vmatprep.mubr.f32.mxu0 0.0
        %292 = vmatmul.mubr.f32.gmra.mrb[0].mxu0 %v225
        %v293 = vpop.f32.mrb[0].mxu0
        %v294 = vadd.f32 0.0, %v293
        %v295 = vpop.f32.mrb[0].mxu0
        %296 = vdwg.mxu0
        %vm297 = vcmask 31744
        %v299 = vsel %vm297, %v215, 0
        %vm301 = vcmask 1043456
        %v303 = vsel %vm301, %v218, 0
        %305 = vmatprep.subr.mxu0 0.0
        %306 = vmatpush1.msra.mxu0 %v303
        %307 = vmatprep.subr.mxu0 0.0
        %308 = vmatpush1.msra.mxu0 0.0
        %309 = vmatprep.subr.mxu0 0.0
        %310 = vmatpush1.msra.mxu0 0.0
        %311 = vmatprep.subr.mxu0 0.0
        %312 = vmatpush1.msra.mxu0 0.0
        %313 = vmatprep.subr.mxu0 0.0
        %314 = vmatpush1.msra.mxu0 0.0
        %315 = vmatprep.subr.mxu0 0.0
        %316 = vmatpush1.msra.mxu0 0.0
        %317 = vmatprep.subr.mxu0 0.0
        %318 = vmatpush1.msra.mxu0 0.0
        %319 = vmatprep.subr.mxu0 0.0
        %320 = vmatpush1.msra.mxu0 0.0
        %321 = vmatprep.subr.mxu0 0.0
        %322 = vmatpush1.msra.mxu0 0.0
        %323 = vmatprep.subr.mxu0 0.0
        %324 = vmatpush1.msra.mxu0 0.0
        %325 = vmatprep.subr.mxu0 0.0
        %326 = vmatpush1.msra.mxu0 0.0
        %327 = vmatprep.subr.mxu0 0.0
        %328 = vmatpush1.msra.mxu0 0.0
        %329 = vmatprep.subr.mxu0 0.0
        %330 = vmatpush1.msra.mxu0 0.0
        %331 = vmatprep.subr.mxu0 0.0
        %332 = vmatpush1.msra.mxu0 0.0
        %333 = vmatprep.subr.mxu0 0.0
        %334 = vmatpush1.msra.mxu0 0.0
        %335 = vmatprep.subr.mxu0 0.0
        %336 = vmatpush1.msra.mxu0 0.0
        %337 = vmatprep.subr.mxu0 0.0
        %338 = vmatpush1.msra.mxu0 0.0
        %339 = vmatprep.subr.mxu0 0.0
        %340 = vmatpush1.msra.mxu0 0.0
        %341 = vmatprep.subr.mxu0 0.0
        %342 = vmatpush1.msra.mxu0 0.0
        %343 = vmatprep.subr.mxu0 0.0
        %344 = vmatpush1.msra.mxu0 0.0
        %345 = vmatprep.subr.mxu0 0.0
        %346 = vmatpush1.msra.mxu0 0.0
        %347 = vmatprep.subr.mxu0 0.0
        %348 = vmatpush1.msra.mxu0 0.0
        %349 = vmatprep.subr.mxu0 0.0
        %350 = vmatpush1.msra.mxu0 0.0
        %351 = vmatprep.subr.mxu0 0.0
        %352 = vmatpush1.msra.mxu0 0.0
        %353 = vmatprep.subr.mxu0 0.0
        %354 = vmatpush1.msra.mxu0 0.0
        %355 = vmatprep.subr.mxu0 0.0
        %356 = vmatpush1.msra.mxu0 0.0
        %357 = vmatprep.subr.mxu0 0.0
        %358 = vmatpush1.msra.mxu0 0.0
        %359 = vmatprep.subr.mxu0 0.0
        %360 = vmatpush1.msra.mxu0 0.0
        %361 = vmatprep.subr.mxu0 0.0
        %362 = vmatpush1.msra.mxu0 0.0
        %363 = vmatprep.subr.mxu0 0.0
        %364 = vmatpush1.msra.mxu0 0.0
        %365 = vmatprep.subr.mxu0 0.0
        %366 = vmatpush1.msra.mxu0 0.0
        %367 = vmatprep.subr.mxu0 0.0
        %368 = vmatpush1.msra.mxu0 0.0
        %369 = vmatprep.mubr.f32.mxu0 0.0
        %370 = vmatmul.mubr.f32.gmra.mrb[0].mxu0 %v299
        %v371 = vpop.f32.mrb[0].mxu0
        %v372 = vadd.f32 %v294, %v371
        %v373 = vpop.f32.mrb[0].mxu0
        %374 = vdwg.mxu0
        %v375 = vld [vmem:[%s3] sm:$0x1]
        %v377 = vlaneseq
        %v378 = vshrl.u32 %v377, 7
        %v379 = vsub.s32 0, %v378
        %v380 = vrot.slane %v375, %v379
        %v382 = vadd.f32 %v372, %v380
        %v383 = vsub.f32 0.0, %v382
        %v384 = vmul.f32 %v383, 1.442695
        %v385 = vpow.pop %v384
        %v386 = vadd.f32 %v385, 1.0
        %v387 = vrcp.pop %v386
        %v388 = vmul.f32 1.0, %v387
        %v389 = vtanh.pop %v382
        %391 = vrot.lane.b32.xlu0 %v217, 32
        %v392 = vpop.permute.xlu0 %391
        %v394 = vmul.f32 %v388, %v392
        %396 = vrot.lane.b32.xlu0 %v389, 64
        %v397 = vpop.permute.xlu0 %396
        %v399 = vmul.f32 %v388, %v397
        %401 = vrot.lane.b32.xlu0 %v399, 32
        %v402 = vpop.permute.xlu0 %401
        %v404 = vadd.f32 %v394, %v402
        %v405 = vtanh.pop %v404
        %407 = vrot.lane.b32.xlu0 %v405, 64
        %v408 = vpop.permute.xlu0 %407
        %v410 = vmul.f32 %v388, %v408
        %412 = vrot.lane.b32.xlu0 %v410, 32
        %v413 = vpop.permute.xlu0 %412
        %vm415 = vcmask 254976
        %416 = vst.msk [vmem:[#allocation2] sm:$0x3] %vm415, %v413
        %418 = vrot.lane.b32.xlu0 %v404, 96
        %v419 = vpop.permute.xlu0 %418
        %421 = vst.msk [vmem:[#allocation3] sm:$0x3] %vm415, %v419
        %422 = vst.msk [vmem:[%s203] sm:$0x3] %vm415, %v413
        %s423 = sand.u32 %s116, 1
        %s424 = scalar_lea.sflag [#allocation6], %s423
        %s425 = sand.u32 %s116, 1
        %s426 = smul.addr %s425, 2
        %s427 = scalar_lea.vmem [#allocation7], %s426
        // Predicated region
        $region45: #{tpu_custom_call.1} parent=35 // pred_check
          %p428 = pneg %p126
        $region46: #{tpu_custom_call.1} parent=35 // pred_check_branch
          %430 = sbr.rel (%p428) target = $region48
        $region47: #{tpu_custom_call.1} parent=35 // pred_region
          %s432 = ssub.s32 32, 32
          %433 = vsyncadd %s424, %s432
          %s434 = smul.addr %s19, 32
          %s435 = scalar_lea.hbm %s4, %s434
          %s437 = sshll.u32 %s427, 4
          %s438 = int_to_ptr.vmem [resolvable:$true] %s437
          %440 = dma.vmem_to_hbm [thread:$0]  %s438, 32, %s435, %s424
        $region48: #{tpu_custom_call.1} parent=35 // pred_fallthru
          _
      $region36: #{tpu_custom_call.1} parent=5 // pred_fallthru
        _
      %p441 = scmp.le.s32.totalorder 2, %s14
      // Predicated region
      $region49: #{tpu_custom_call.1} parent=5 // pred_check
        %p442 = pneg %p441
      $region50: #{tpu_custom_call.1} parent=5 // pred_check_branch
        %444 = sbr.rel (%p442) target = $region52
      $region51: #{tpu_custom_call.1} parent=5 // pred_region
        %s445 = ssub.s32 %s14, 2
        // Predicated region
        $region53: #{tpu_custom_call.1} parent=51 // pred_check
          %p446 = pneg %p132
        $region54: #{tpu_custom_call.1} parent=51 // pred_check_branch
          %448 = sbr.rel (%p446) target = $region56
        $region55: #{tpu_custom_call.1} parent=51 // pred_region
          %s449 = sand.u32 %s117, 1
          %s450 = scalar_lea.sflag [#allocation6], %s449
          %s451 = sand.u32 %s117, 1
          %s452 = smul.addr %s451, 2
          %s453 = scalar_lea.vmem [#allocation7], %s452
          %454 = dma.done %s450, 32
        $region56: #{tpu_custom_call.1} parent=51 // pred_fallthru
          _
      $region52: #{tpu_custom_call.1} parent=5 // pred_fallthru
        _
    $region6: #{tpu_custom_call.1} parent=1 // loop_footer
      %s18 = sadd.s32 1, %s14
    $region7: #{tpu_custom_call.1} parent=1 // loop_footer_branch
      %13 = sbr.rel target = $region3
    $region8: #{tpu_custom_call.1} parent=1 // loop_exit
      _
    %455 = vsyncpa [#allocation5], 1
    %s456 = scalar_lea.sflag [#allocation5], 1
    %457 = vsyncpa %s456, 1
    %458 = vsyncpa [#allocation6], 1
    %s459 = scalar_lea.sflag [#allocation6], 1
    %460 = vsyncpa %s459, 1

</llo_original>
